<compile_context>
chip_gen: v6e
topology: v6e:2x2x1
jax: 0.10.0
libtpu: 0.0.40
codegen_flags: <defaults>
</compile_context>

<pallas_src>
import functools

import jax
import jax.numpy as jnp
from jax import lax
from jax.experimental import pallas as pl
from jax.experimental.pallas import tpu as pltpu


_BLOCK_BUDGET = 8 * 1024 * 1024   # ~8 MiB input blocks (double-buffered by Pallas)
_TEMP_BUDGET = 4 * 1024 * 1024    # cap on per-chunk f32 intermediates in the kernel
_MAX_ROWS = 8192                  # caps the (TB, 128) f32 partial accumulator at 4 MiB


def _device_generation():
    """Best-effort TPU generation string ('v5', 'v6', 'v7', ... or '')."""
    try:
        kind = jax.devices()[0].device_kind.lower()
    except Exception:
        return ""
    for g in ("v7", "v6", "v5", "v4"):
        if g in kind:
            return g
    return ""


def _int_pow(x, n):
    """x ** n for a small positive Python int n, via VPU multiplies only."""
    result = None
    base = x
    while True:
        if n & 1:
            result = base if result is None else result * base
        n >>= 1
        if n == 0:
            return result
        base = base * base


def _pow_p(x, *, p, eps, int_p, half_p, compute_dtype):
    """clamp(x, eps) ** p, elementwise, returned as float32."""
    x = x.astype(compute_dtype)
    xc = jnp.maximum(x, jnp.asarray(eps, x.dtype))
    if int_p is not None:
        xp = _int_pow(xc, int_p)                        # VPU multiplies only
    elif half_p is not None:
        r = jnp.sqrt(xc)                                # single EUP op per element
        xp = r if half_p == 0 else _int_pow(xc, half_p) * r
    else:
        xf = xc.astype(jnp.float32)
        xp = jnp.exp(jnp.float32(p) * jnp.log(xf))      # general p: 2 EUP ops / element
    return xp.astype(jnp.float32)


def _root_p(m, p):
    """m ** (1/p) for the tiny pooled result (float32)."""
    if p == 1.0:
        return m
    if p == 2.0:
        return jnp.sqrt(m)
    return jnp.exp(jnp.log(m) * (1.0 / p))


def _gem_rows_kernel(x_ref, o_ref, *, p, eps, inv_area, int_p, half_p,
                     compute_dtype, chunk, n_chunks, tail):
    """(TB, L) rows of flattened pooling windows -> (TB, 1) pooled values."""
    tb = x_ref.shape[0]
    powp = functools.partial(_pow_p, p=p, eps=eps, int_p=int_p, half_p=half_p,
                             compute_dtype=compute_dtype)

    if n_chunks > 0:
        def body(c, acc):
            start = pl.multiple_of(c * chunk, chunk)
            xp = powp(x_ref[:, pl.ds(start, chunk)])          # (TB, chunk) f32
            # Fold the chunk's lanes down to 128 with plain VPU adds (no XLU);
            # the 128-wide static slices are lane-aligned vreg selections.
            part = xp[:, 0:128]
            for k in range(1, chunk // 128):
                part = part + xp[:, k * 128:(k + 1) * 128]
            return acc + part

        acc = lax.fori_loop(0, n_chunks, body, jnp.zeros((tb, 128), jnp.float32))
        total = jnp.sum(acc, axis=-1, keepdims=True)          # ONE XLU reduce / block
    else:
        total = jnp.zeros((tb, 1), jnp.float32)

    if tail > 0:   # L not a multiple of the chunk (or L < 128 on v5e): one extra slice
        xp_t = powp(x_ref[:, pl.ds(n_chunks * chunk, tail)])
        total = total + jnp.sum(xp_t, axis=-1, keepdims=True)

    m = total * inv_area
    o_ref[...] = _root_p(m, p).astype(o_ref.dtype)            # single store per block


def _gem_cols_kernel(x_ref, o_ref, *, p, eps, inv_area, int_p, half_p,
                     compute_dtype, chunk, n_chunks, tail):
    """(L, TN) windows-on-sublanes -> lane-dense (1, TN) pooled row."""
    powp = functools.partial(_pow_p, p=p, eps=eps, int_p=int_p, half_p=half_p,
                             compute_dtype=compute_dtype)

    def reduce_slice(xs):
        m = jnp.sum(powp(xs), axis=0, keepdims=True) * inv_area     # (1, width)
        return _root_p(m, p).astype(o_ref.dtype)

    if n_chunks > 0:
        @pl.loop(0, n_chunks)
        def _(c):
            start = pl.multiple_of(c * chunk, chunk)
            o_ref[:, pl.ds(start, chunk)] = reduce_slice(x_ref[:, pl.ds(start, chunk)])

    if tail > 0:
        start = n_chunks * chunk
        o_ref[:, pl.ds(start, tail)] = reduce_slice(x_ref[:, pl.ds(start, tail)])


def _choose_tile(n, unit_bytes, multiple, budget_bytes, max_units):
    """Units (rows / lane-columns) per grid step.

    Sized to ~budget_bytes so the ~0.35 us per-step overhead stays <5% of the
    block DMA time, rounded to `multiple` (dtype sublane packing / lane width),
    and when several steps are needed the step count is nudged to be even so
    v7x's two TensorCores split the 'parallel' grid evenly (no-op on v5e/v6e).
    """
    t = min(budget_bytes // max(unit_bytes, 1), max_units)
    t = max(multiple, (t // multiple) * multiple)
    if t >= n:
        return n                                    # one block covers everything
    for cand in range(t, max(multiple, t - 8 * multiple) - 1, -multiple):
        if (-(-n // cand)) % 2 == 0:
            return cand
    return t


def _chunking(width, rows):
    """Split `width` lanes into (chunk, n_chunks, tail).

    chunk is a multiple of 128, <= 1024, and small enough that a (rows, chunk)
    f32 temporary stays within _TEMP_BUDGET (bounds in-kernel VMEM pressure).
    """
    by_budget = (_TEMP_BUDGET // max(rows * 4, 1)) // 128 * 128
    chunk = max(128, min(1024, by_budget if by_budget > 0 else 128))
    lane_aligned = (width // 128) * 128
    if lane_aligned == 0:
        return chunk, 0, width          # whole width handled as one (masked) tail
    chunk = min(chunk, lane_aligned)
    n_chunks = width // chunk
    return chunk, n_chunks, width - n_chunks * chunk


def gem_pooling(x, p=3.0, output_size=(1, 1), eps=1e-6):
    """GeM pooling. x: (B, C, H, W) NCHW. Returns (B, C, oh, ow) in x.dtype."""
    if isinstance(output_size, int):
        output_size = (output_size, output_size)
    B, C, H, W = x.shape
    oh, ow = output_size
    oh = H if oh is None else oh
    ow = W if ow is None else ow
    assert H % oh == 0 and W % ow == 0, "spatial dims must be multiples of output_size"
    # TODO(synk): PyTorch adaptive_avg_pool2d also supports non-divisible output
    # sizes (uneven windows); only the evenly-divisible case is implemented here.
    kh, kw = H // oh, W // ow
    L = kh * kw
    N = B * C * oh * ow

    p = float(p)
    assert p > 0
    eps = float(eps)

    # Fast-exponent decomposition: integer p -> VPU muls; half-integer p ->
    # muls + one sqrt; anything else pays exp+log per input element on the EUP.
    int_p = half_p = None
    if p == round(p) and 1 <= p <= 16:
        int_p = int(round(p))
    elif 2 * p == round(2 * p) and 0 < p <= 16:
        half_p = int(p)

    gen = _device_generation()
    itemsize = x.dtype.itemsize
    sub = max(8, 32 // itemsize)          # sublane multiple: 8 f32 / 16 bf16 / 32 int8

    # bf16 elementwise math stays bf16 on v6e/v7x (native bf16 VPU, halves VALU
    # work); the accumulation is always f32.  v5e has no bf16 VPU -> upcast to f32.
    if (x.dtype == jnp.bfloat16 and gen in ("v6", "v7")
            and (int_p is not None or half_p is not None)):
        compute_dtype = jnp.bfloat16
    else:
        compute_dtype = jnp.float32

    # Flatten every pooling window into one contiguous row: (N, L).
    if oh == 1 and ow == 1:
        flat = x.reshape(N, L)            # pure reshape, no data movement
    else:
        # TODO(synk): express the general window layout via a strided BlockSpec /
        # grid instead of this extra reshape+transpose HBM pass.
        flat = (x.reshape(B, C, oh, kh, ow, kw)
                  .transpose(0, 1, 2, 4, 3, 5)
                  .reshape(N, L))

    # Advisory cost estimate so XLA schedules/overlaps the custom call sensibly.
    elems = N * L
    if int_p is not None:
        flops, trans = elems * (2 + int_p), 0
    elif half_p is not None:
        flops, trans = elems * (3 + half_p), elems
    else:
        flops, trans = elems * 3, 2 * elems
    cost = pl.CostEstimate(flops=flops, transcendentals=trans,
                           bytes_accessed=elems * itemsize + N * itemsize)

    # v7x has only 64 MiB physical VMEM -> stay well under it; v5e/v6e have 128 MiB.
    vmem_limit = (48 if gen in ("v7", "") else 64) * 1024 * 1024
    compiler_params = pltpu.CompilerParams(
        dimension_semantics=("parallel",), vmem_limit_bytes=vmem_limit)

    # Small windows (L < 128, e.g. 7x7 heads): transpose once so windows sit on
    # sublanes and output is lane-dense.  Not worth the extra HBM pass on v5e.
    use_transposed = (L < 128) and gen != "v5"

    if use_transposed:
        flat_t = flat.T                                          # (L, N)
        TN = _choose_tile(N, L * itemsize, 128, _BLOCK_BUDGET, max_units=1 << 31)
        chunk, n_chunks, tail = _chunking(TN, L)
        kernel = functools.partial(
            _gem_cols_kernel, p=p, eps=eps, inv_area=1.0 / L, int_p=int_p,
            half_p=half_p, compute_dtype=compute_dtype,
            chunk=chunk, n_chunks=n_chunks, tail=tail)
        out = pl.pallas_call(
            kernel,
            out_shape=jax.ShapeDtypeStruct((1, N), x.dtype),
            grid_spec=pltpu.PrefetchScalarGridSpec(
                num_scalar_prefetch=0,
                grid=(pl.cdiv(N, TN),),
                in_specs=[pl.BlockSpec((L, TN), lambda i: (0, i))],
                out_specs=pl.BlockSpec((1, TN), lambda i: (0, i)),
            ),
            compiler_params=compiler_params,
            cost_estimate=cost,
        )(flat_t)
    else:
        TB = _choose_tile(N, L * itemsize, sub, _BLOCK_BUDGET, max_units=_MAX_ROWS)
        chunk, n_chunks, tail = _chunking(L, TB)
        # TODO(synk): for enormous windows (sub * L * itemsize >> _BLOCK_BUDGET) add
        # a second ("arbitrary") grid axis over L with a VMEM accumulator.
        kernel = functools.partial(
            _gem_rows_kernel, p=p, eps=eps, inv_area=1.0 / L, int_p=int_p,
            half_p=half_p, compute_dtype=compute_dtype,
            chunk=chunk, n_chunks=n_chunks, tail=tail)
        out = pl.pallas_call(
            kernel,
            out_shape=jax.ShapeDtypeStruct((N, 1), x.dtype),
            grid_spec=pltpu.PrefetchScalarGridSpec(
                num_scalar_prefetch=0,
                grid=(pl.cdiv(N, TB),),
                in_specs=[pl.BlockSpec((TB, L), lambda i: (i, 0))],
                out_specs=pl.BlockSpec((TB, 1), lambda i: (i, 0)),
            ),
            compiler_params=compiler_params,
            cost_estimate=cost,
        )(flat)

    return out.reshape(B, C, oh, ow)


def _gem_ref(x, p, output_size, eps):
    """Pure-JAX reference mirroring the PyTorch math."""
    B, C, H, W = x.shape
    oh, ow = output_size
    kh, kw = H // oh, W // ow
    xp = jnp.clip(x, eps, None) ** p
    m = xp.reshape(B, C, oh, kh, ow, kw).mean(axis=(3, 5))
    return m ** (1.0 / p)


if __name__ == "__main__":
    key = jax.random.PRNGKey(0)
    eps = 1e-6

    cases = [
        # (shape,            p,   output_size)
        ((2, 4, 16, 16),     3.0, (1, 1)),   # default reid config: rows path (L=256)
        ((2, 4, 7, 7),       3.0, (1, 1)),   # small window: transposed lane-dense path
        ((2, 3, 8, 8),       2.5, (2, 2)),   # general output size + half-integer p
        ((1, 2, 16, 16),     3.3, (1, 1)),   # non-integer exponent (EUP path)
    ]

    for idx, (shape, p, osize) in enumerate(cases):
        k = jax.random.fold_in(key, idx)
        x = jax.random.uniform(k, shape, dtype=jnp.float32)
        out = jax.block_until_ready(gem_pooling(x, p=p, output_size=osize, eps=eps))
        ref = _gem_ref(x, p, osize, eps)
        assert out.shape == ref.shape, f"shape mismatch in case {idx}"
        assert jnp.allclose(out, ref, atol=1e-5, rtol=1e-4), f"mismatch vs reference in case {idx}"

    print("KERNEL_OK")
</pallas_src>

<mosaic_0001>
module attributes {stable_mosaic.version = 11 : i64} {
  func.func @_gem_rows_kernel(%arg0: i32, %arg1: memref<8x256xf32, #tpu.memory_space<vmem>>, %arg2: memref<8x1xf32, #tpu.memory_space<vmem>>) attributes {dimension_semantics = [#tpu.dimension_semantics<parallel>], iteration_bounds = array<i64: 1>, scalar_prefetch = 0 : i64, scratch_operands = 0 : i64, tpu.core_type = #tpu.core_type<tc>, window_params = [{transform_indices = @transform_0, window_bounds = array<i64: 8, 256>}, {transform_indices = @transform_1, window_bounds = array<i64: 8, 1>}]} {
    %cst = arith.constant 0.000000e+00 : f32
    %0 = vector.broadcast %cst : f32 to vector<8x128xf32>
    %c0_i32 = arith.constant 0 : i32
    %c256_i32 = arith.constant 256 : i32
    %1 = arith.muli %c0_i32, %c256_i32 : i32
    %2 = tpu.assume_multiple %1, 256 : i32
    %c0 = arith.constant 0 : index
    %3 = arith.index_cast %2 : i32 to index
    %4 = vector.load %arg1[%c0, %3] : memref<8x256xf32, #tpu.memory_space<vmem>>, vector<8x256xf32>
    %cst_0 = arith.constant 9.99999997E-7 : f32
    %5 = vector.broadcast %cst_0 : f32 to vector<8x256xf32>
    %6 = arith.maximumf %4, %5 : vector<8x256xf32>
    %7 = arith.mulf %6, %6 : vector<8x256xf32>
    %8 = arith.mulf %6, %7 : vector<8x256xf32>
    %9 = vector.extract_strided_slice %8 {offsets = [0, 0], sizes = [8, 128], strides = [1, 1]} : vector<8x256xf32> to vector<8x128xf32>
    %10 = vector.extract_strided_slice %8 {offsets = [0, 128], sizes = [8, 128], strides = [1, 1]} : vector<8x256xf32> to vector<8x128xf32>
    %11 = arith.addf %9, %10 : vector<8x128xf32>
    %12 = arith.addf %0, %11 : vector<8x128xf32>
    %c1_i32 = arith.constant 1 : i32
    %cst_1 = arith.constant dense<0.000000e+00> : vector<8xf32>
    %13 = vector.multi_reduction <add>, %12, %cst_1 [1] : vector<8x128xf32> to vector<8xf32>
    %14 = vector.shape_cast %13 : vector<8xf32> to vector<8x1xf32>
    %cst_2 = arith.constant 3.906250e-03 : f32
    %15 = vector.broadcast %cst_2 : f32 to vector<8x1xf32>
    %16 = arith.mulf %14, %15 : vector<8x1xf32>
    %17 = math.log %16 : vector<8x1xf32>
    %cst_3 = arith.constant 0.333333343 : f32
    %18 = vector.broadcast %cst_3 : f32 to vector<8x1xf32>
    %19 = arith.mulf %17, %18 : vector<8x1xf32>
    %20 = math.exp %19 : vector<8x1xf32>
    %c0_4 = arith.constant 0 : index
    %c0_5 = arith.constant 0 : index
    %21 = vector.load %arg2[%c0_4, %c0_5] : memref<8x1xf32, #tpu.memory_space<vmem>>, vector<8x1xf32>
    tpu.vector_store %arg2[%c0_4, %c0_5], %20 {strides = array<i32>} : memref<8x1xf32, #tpu.memory_space<vmem>>, vector<8x1xf32>,
    return
  }
  func.func @transform_0(%arg0: i32) -> (i32, i32) {
    %c0_i32 = arith.constant 0 : i32
    %c0_i32_0 = arith.constant 0 : i32
    return %arg0, %c0_i32 : i32, i32
  }
  func.func @transform_1(%arg0: i32) -> (i32, i32) {
    %c0_i32 = arith.constant 0 : i32
    %c0_i32_0 = arith.constant 0 : i32
    return %arg0, %c0_i32 : i32, i32
  }
}

</mosaic_0001>

<llo_original>
// kernel: tpu_custom_call.1
$region0: #{tpu_custom_call.1}
  #allocation0 [shape = 'u32[]', space=smem, size = 0x4, offset = 0x4, fixed_abs, tag = 'smem constant byte address 0x4 - core index']
  #allocation1 [shape = 'u32[144,128]{1,0:T(1,128)}', space=vmem, size = 0x12000, scoped, tag = 'internal scratch']
  %s0 = inlined_call_operand.hbm [shape: f32[8,256], index: 0, kind: input, shape index: {}]
  %s1 = inlined_call_operand.vmem [shape: f32[8,1], index: 1, kind: output, shape index: {}]
  %s2 = sld [smem:[#allocation0]]
  $region18: #{tpu_custom_call.1} parent=0
    _
  %s4 = ssub.s32 1, %s2
  %s5 = scalar_select 0, %s4, %s2
  $region1: #{tpu_custom_call.1} parent=0
    #allocation2 [shape = 'u8[8192]{0}', space=vmem, size = 0x2000, scoped, tag = 'input window, operand 0, single buffered']
    #allocation3 [shape = 's32[1]{0}', space=sflag, size = 0x4, scoped, tag = 'scoped memory for tpu_custom_call.1']
    %6 = vsyncpa [#allocation3], 0
    // Predicated region
    $region2: #{tpu_custom_call.1} parent=1 // pred_check
      _
    $region3: #{tpu_custom_call.1} parent=1 // pred_check_branch
      %8 = sbr.rel (0) target = $region5
    $region4: #{tpu_custom_call.1} parent=1 // pred_region
      %s10 = ssub.s32 256, 256
      %11 = vsyncadd [#allocation3], %s10
      %s13 = sshll.u32 [#allocation2], 4
      %s14 = int_to_ptr.vmem [resolvable:$true] %s13
      %16 = dma.hbm_to_vmem [thread:$0]  %s0, 256, %s14, [#allocation3]
    $region5: #{tpu_custom_call.1} parent=1 // pred_fallthru
      _
    // Predicated region
    $region6: #{tpu_custom_call.1} parent=1 // pred_check
      _
    $region7: #{tpu_custom_call.1} parent=1 // pred_check_branch
      %18 = sbr.rel (0) target = $region9
    $region8: #{tpu_custom_call.1} parent=1 // pred_region
      %19 = dma.done [#allocation3], 256
    $region9: #{tpu_custom_call.1} parent=1 // pred_fallthru
      _
    %v20 = vld [vmem:[#allocation2] sm:$0xff]
    %v21 = vld [vmem:[#allocation2 + $0x8] sm:$0xff]
    %v22 = vmax.f32 %v20, 1e-06
    %v23 = vmax.f32 %v21, 1e-06
    %v24 = vmul.f32 %v22, %v22
    %v25 = vmul.f32 %v23, %v23
    %v26 = vmul.f32 %v22, %v24
    %v27 = vmul.f32 %v23, %v25
    %v28 = vadd.f32 %v26, %v27
    %v29 = vadd.f32 %v28, 0.0
    %30 = vadd.xlane.f32.xlu0 %v29
    %v31 = vpop.xlane.xlu0 %30
    %v32 = vmul.f32 %v31, 0.00390625
    %v33 = vlog2.pop %v32
    %v34 = vmul.f32 %v33, 0.6931472
    %v35 = vmul.f32 %v34, 0.33333334
    %v36 = vmul.f32 %v35, 1.442695
    %v37 = vpow.pop %v36
    %vm38 = vcmask 7168
    %39 = vst.msk [vmem:[%s1] sm:$0xff] %vm38, %v37
    // Predicated region
    $region10: #{tpu_custom_call.1} parent=1 // pred_check
      _
    $region11: #{tpu_custom_call.1} parent=1 // pred_check_branch
      %41 = sbr.rel (0) target = $region13
    $region12: #{tpu_custom_call.1} parent=1 // pred_region
      _
    $region13: #{tpu_custom_call.1} parent=1 // pred_fallthru
      _
    // Predicated region
    $region14: #{tpu_custom_call.1} parent=1 // pred_check
      _
    $region15: #{tpu_custom_call.1} parent=1 // pred_check_branch
      %43 = sbr.rel (0) target = $region17
    $region16: #{tpu_custom_call.1} parent=1 // pred_region
      _
    $region17: #{tpu_custom_call.1} parent=1 // pred_fallthru
      _
    %44 = vsyncpa [#allocation3], 1

</llo_original>
